<compile_context>
chip_gen: v7x
topology: tpu7x:2x2x1
jax: 0.10.0
libtpu: 0.0.40
codegen_flags: <defaults>
</compile_context>

<pallas_src>
import functools
import math

import jax
import jax.numpy as jnp
from jax import lax
from jax.experimental import pallas as pl
from jax.experimental.pallas import tpu as pltpu

_HALF_LOG_2PI = 0.5 * math.log(2.0 * math.pi)
# Double-buffered pipeline VMEM budget: safe inside default scoped VMEM on
# v6e/v7x (32 MiB) and raised explicitly past v5e's 16 MiB default below.
_DEFAULT_PIPELINE_BUDGET = 24 * 1024 * 1024


def _emission_kernel(x_ref, mean_ref, std_ref, len_ref, out_ref, *, approx_recip):
    # x_ref   : VMEM [TB, D]      observations for this batch tile
    # mean_ref: VMEM [TB, H, D]
    # std_ref : VMEM [TB, H, D]
    # len_ref : VMEM i32[TB, 1]   state_lengths column for this tile
    # out_ref : VMEM f32[TB, H]
    d = mean_ref.shape[-1]

    x = x_ref[...].astype(jnp.float32)     # (TB, D)
    mu = mean_ref[...].astype(jnp.float32)  # (TB, H, D)
    sd = std_ref[...].astype(jnp.float32)   # (TB, H, D)

    if approx_recip:
        z = (x[:, None, :] - mu) * pl.reciprocal(sd, approx=True)
    else:
        z = (x[:, None, :] - mu) / sd       # exact; matches reference tightly

    # Single fused XLU reduction over the feature (lane) dim:
    #   lp = -0.5 * sum_d [ z^2 + 2*log(sd) ] - D * 0.5*log(2*pi)
    t = z * z + 2.0 * jnp.log(sd)
    lp = -0.5 * jnp.sum(t, axis=-1) - d * _HALF_LOG_2PI          # (TB, H)

    # sequence_mask(state_lengths): zero out states h >= state_lengths[b].
    h_idx = lax.broadcasted_iota(jnp.int32, lp.shape, dimension=1)
    mask = h_idx < len_ref[...]                                  # (TB,1) -> (TB,H)
    out_ref[...] = jnp.where(mask, lp, 0.0).astype(out_ref.dtype)


def _per_row_bytes(H, D, param_itemsize, x_itemsize):
    # Bytes streamed per batch row: means + stds + x + out + lengths.
    return 2 * H * D * param_itemsize + D * x_itemsize + H * 4 + 4


def _select_tb(B, H, D, param_itemsize, x_itemsize, budget_bytes):
    per_row = _per_row_bytes(H, D, param_itemsize, x_itemsize)
    tb = int(budget_bytes // (2 * per_row))        # x2: double-buffered pipeline
    tb = max(8, (tb // 8) * 8)                     # sublane multiple
    if B > 8:
        # Ensure at least two grid steps so both v7x TensorCores get work.
        half = ((-(-B // 2)) + 7) // 8 * 8
        tb = min(tb, half)
    return B if tb >= B else tb


def emission_log_likelihood(x_t, means, stds, state_lengths, *, tb=None,
                            approx_recip=False,
                            vmem_budget_bytes=_DEFAULT_PIPELINE_BUDGET):
    """x_t: (B, D), means/stds: (B, H, D), state_lengths: (B,) int.
    Returns (B, H) float32 observation log-likelihoods."""
    B, H, D = means.shape
    assert x_t.shape == (B, D)
    assert stds.shape == (B, H, D)
    assert state_lengths.shape == (B,)

    p_item = jnp.dtype(means.dtype).itemsize
    x_item = jnp.dtype(x_t.dtype).itemsize

    if tb is None:
        tb = _select_tb(B, H, D, p_item, x_item, vmem_budget_bytes)
    else:
        tb = min(int(tb), B)
        if tb < B:
            tb = max(8, (tb // 8) * 8)  # (tb, D)/(tb, H) sublane divisibility
            if tb >= B:
                tb = B

    grid = (pl.cdiv(B, tb),)
    lens_col = state_lengths.astype(jnp.int32).reshape(B, 1)

    per_row = _per_row_bytes(H, D, p_item, x_item)
    footprint = 2 * tb * per_row                       # double-buffered tiles
    vmem_limit = int(min(max(footprint + (4 << 20), 16 << 20), 64 << 20))

    total = B * H * D
    cost = pl.CostEstimate(
        flops=6 * total,
        transcendentals=2 * total,
        bytes_accessed=2 * total * p_item + B * D * x_item + B * H * 4 + B * 4,
    )

    kernel = functools.partial(_emission_kernel, approx_recip=approx_recip)

    return pl.pallas_call(
        kernel,
        out_shape=jax.ShapeDtypeStruct((B, H), jnp.float32),
        grid=grid,
        in_specs=[
            pl.BlockSpec((tb, D), lambda b: (b, 0)),
            pl.BlockSpec((tb, H, D), lambda b: (b, 0, 0)),
            pl.BlockSpec((tb, H, D), lambda b: (b, 0, 0)),
            pl.BlockSpec((tb, 1), lambda b: (b, 0)),
        ],
        out_specs=pl.BlockSpec((tb, H), lambda b: (b, 0)),
        compiler_params=pltpu.CompilerParams(
            dimension_semantics=("parallel",),
            vmem_limit_bytes=vmem_limit),
        cost_estimate=cost,
    )(x_t, means, stds, lens_col)


def _reference(x_t, means, stds, state_lengths):
    # Pure-JAX reference of the PyTorch forward.
    lp = (-0.5 * ((x_t[:, None, :] - means) / stds) ** 2
          - jnp.log(stds) - _HALF_LOG_2PI)                        # (B, H, D)
    H = means.shape[1]
    mask = (jnp.arange(H)[None, :] < state_lengths[:, None])      # (B, H)
    return jnp.sum(lp * mask[:, :, None], axis=2)                 # (B, H)


if __name__ == "__main__":
    B, H, D = 16, 8, 128
    key = jax.random.PRNGKey(0)
    k1, k2, k3, k4 = jax.random.split(key, 4)

    x_t = jax.random.normal(k1, (B, D), dtype=jnp.float32)
    means = jax.random.normal(k2, (B, H, D), dtype=jnp.float32)
    stds = 0.5 + jax.nn.softplus(
        jax.random.normal(k3, (B, H, D), dtype=jnp.float32))
    state_lengths = jax.random.randint(k4, (B,), 1, H + 1, dtype=jnp.int32)

    ref = _reference(x_t, means, stds, state_lengths)

    # Default path: budget-driven tb (here -> 8, grid=(2,), megacore-friendly).
    out = emission_log_likelihood(x_t, means, stds, state_lengths)
    out = jax.block_until_ready(out)
    assert out.shape == (B, H)
    assert jnp.allclose(out, ref, atol=1e-3, rtol=1e-4), (out, ref)

    # Full-batch single-tile path (tb == B).
    out_full = emission_log_likelihood(x_t, means, stds, state_lengths, tb=B)
    out_full = jax.block_until_ready(out_full)
    assert jnp.allclose(out_full, ref, atol=1e-3, rtol=1e-4), (out_full, ref)

    # Approximate-reciprocal (EUP) path, looser tolerance by construction.
    out_approx = emission_log_likelihood(x_t, means, stds, state_lengths,
                                         approx_recip=True)
    out_approx = jax.block_until_ready(out_approx)
    assert jnp.allclose(out_approx, ref, atol=5e-2, rtol=1e-3), (out_approx, ref)

    print("KERNEL_OK")
</pallas_src>

<mosaic_0001>
module attributes {stable_mosaic.version = 11 : i64} {
  func.func @_emission_kernel(%arg0: i32, %arg1: memref<8x128xf32, #tpu.memory_space<vmem>>, %arg2: memref<8x8x128xf32, #tpu.memory_space<vmem>>, %arg3: memref<8x8x128xf32, #tpu.memory_space<vmem>>, %arg4: memref<8x1xi32, #tpu.memory_space<vmem>>, %arg5: memref<8x8xf32, #tpu.memory_space<vmem>>) attributes {dimension_semantics = [#tpu.dimension_semantics<parallel>], iteration_bounds = array<i64: 2>, scalar_prefetch = 0 : i64, scratch_operands = 0 : i64, tpu.core_type = #tpu.core_type<tc>, window_params = [{transform_indices = @transform_0, window_bounds = array<i64: 8, 128>}, {transform_indices = @transform_1, window_bounds = array<i64: 8, 8, 128>}, {transform_indices = @transform_2, window_bounds = array<i64: 8, 8, 128>}, {transform_indices = @transform_3, window_bounds = array<i64: 8, 1>}, {transform_indices = @transform_4, window_bounds = array<i64: 8, 8>}]} {
    %c0 = arith.constant 0 : index
    %c0_0 = arith.constant 0 : index
    %0 = vector.load %arg1[%c0, %c0_0] : memref<8x128xf32, #tpu.memory_space<vmem>>, vector<8x128xf32>
    %c0_1 = arith.constant 0 : index
    %c0_2 = arith.constant 0 : index
    %c0_3 = arith.constant 0 : index
    %1 = vector.load %arg2[%c0_1, %c0_2, %c0_3] : memref<8x8x128xf32, #tpu.memory_space<vmem>>, vector<8x8x128xf32>
    %c0_4 = arith.constant 0 : index
    %c0_5 = arith.constant 0 : index
    %c0_6 = arith.constant 0 : index
    %2 = vector.load %arg3[%c0_4, %c0_5, %c0_6] : memref<8x8x128xf32, #tpu.memory_space<vmem>>, vector<8x8x128xf32>
    %3 = vector.shape_cast %0 : vector<8x128xf32> to vector<8x1x128xf32>
    %4 = vector.broadcast %3 : vector<8x1x128xf32> to vector<8x8x128xf32>
    %5 = arith.subf %4, %1 : vector<8x8x128xf32>
    %6 = arith.divf %5, %2 : vector<8x8x128xf32>
    %7 = arith.mulf %6, %6 : vector<8x8x128xf32>
    %8 = math.log %2 : vector<8x8x128xf32>
    %cst = arith.constant 2.000000e+00 : f32
    %9 = vector.broadcast %cst : f32 to vector<8x8x128xf32>
    %10 = arith.mulf %9, %8 : vector<8x8x128xf32>
    %11 = arith.addf %7, %10 : vector<8x8x128xf32>
    %cst_7 = arith.constant dense<0.000000e+00> : vector<8x8xf32>
    %12 = vector.multi_reduction <add>, %11, %cst_7 [2] : vector<8x8x128xf32> to vector<8x8xf32>
    %cst_8 = arith.constant -5.000000e-01 : f32
    %13 = vector.broadcast %cst_8 : f32 to vector<8x8xf32>
    %14 = arith.mulf %13, %12 : vector<8x8xf32>
    %cst_9 = arith.constant 117.62413 : f32
    %15 = vector.broadcast %cst_9 : f32 to vector<8x8xf32>
    %16 = arith.subf %14, %15 : vector<8x8xf32>
    %17 = tpu.iota {dimensions = array<i32: 1>} : vector<8x8xi32>
    %c0_10 = arith.constant 0 : index
    %c0_11 = arith.constant 0 : index
    %18 = vector.load %arg4[%c0_10, %c0_11] : memref<8x1xi32, #tpu.memory_space<vmem>>, vector<8x1xi32>
    %19 = vector.broadcast %18 : vector<8x1xi32> to vector<8x8xi32>
    %20 = arith.cmpi slt, %17, %19 : vector<8x8xi32>
    %cst_12 = arith.constant 0.000000e+00 : f32
    %21 = vector.broadcast %cst_12 : f32 to vector<8x8xf32>
    %22 = arith.select %20, %16, %21 : vector<8x8xi1>, vector<8x8xf32>
    %c0_13 = arith.constant 0 : index
    %c0_14 = arith.constant 0 : index
    %23 = vector.load %arg5[%c0_13, %c0_14] : memref<8x8xf32, #tpu.memory_space<vmem>>, vector<8x8xf32>
    tpu.vector_store %arg5[%c0_13, %c0_14], %22 {strides = array<i32>} : memref<8x8xf32, #tpu.memory_space<vmem>>, vector<8x8xf32>,
    return
  }
  func.func @transform_0(%arg0: i32) -> (i32, i32) {
    %c0_i32 = arith.constant 0 : i32
    %c0_i32_0 = arith.constant 0 : i32
    return %arg0, %c0_i32 : i32, i32
  }
  func.func @transform_1(%arg0: i32) -> (i32, i32, i32) {
    %c0_i32 = arith.constant 0 : i32
    %c0_i32_0 = arith.constant 0 : i32
    %c0_i32_1 = arith.constant 0 : i32
    return %arg0, %c0_i32, %c0_i32_0 : i32, i32, i32
  }
  func.func @transform_2(%arg0: i32) -> (i32, i32, i32) {
    %c0_i32 = arith.constant 0 : i32
    %c0_i32_0 = arith.constant 0 : i32
    %c0_i32_1 = arith.constant 0 : i32
    return %arg0, %c0_i32, %c0_i32_0 : i32, i32, i32
  }
  func.func @transform_3(%arg0: i32) -> (i32, i32) {
    %c0_i32 = arith.constant 0 : i32
    %c0_i32_0 = arith.constant 0 : i32
    return %arg0, %c0_i32 : i32, i32
  }
  func.func @transform_4(%arg0: i32) -> (i32, i32) {
    %c0_i32 = arith.constant 0 : i32
    %c0_i32_0 = arith.constant 0 : i32
    return %arg0, %c0_i32 : i32, i32
  }
}

</mosaic_0001>

<llo_original>
// kernel: tpu_custom_call.1
$region0: #{tpu_custom_call.1}
  #allocation0 [shape = 'u32[]', space=smem, size = 0x4, offset = 0x4, fixed_abs, tag = 'smem constant byte address 0x4 - core index']
  #allocation1 [shape = 'u32[144,128]{1,0:T(1,128)}', space=vmem, size = 0x12000, scoped, tag = 'internal scratch']
  %s0 = inlined_call_operand.vmem [shape: f32[16,128], index: 0, kind: input, shape index: {}]
  %s1 = inlined_call_operand.hbm [shape: f32[16,8,128], index: 1, kind: input, shape index: {}]
  %s2 = inlined_call_operand.hbm [shape: f32[16,8,128], index: 2, kind: input, shape index: {}]
  %s3 = inlined_call_operand.vmem [shape: s32[16,1], index: 3, kind: input, shape index: {}]
  %s4 = inlined_call_operand.vmem [shape: f32[16,8], index: 4, kind: output, shape index: {}]
  %s5 = sld [smem:[#allocation0]]
  $region57: #{tpu_custom_call.1} parent=0
    _
  %s7 = ssub.s32 1, %s5
  %s8 = scalar_select 0, %s7, %s5
  $region1: #{tpu_custom_call.1} parent=0
    #allocation2 [shape = 'u8[65536]{0}', space=vmem, size = 0x10000, scoped, tag = 'input window, operand 1']
    #allocation3 [shape = 's32[2]{0}', space=sflag, size = 0x8, scoped, tag = 'scoped memory for tpu_custom_call.1']
    #allocation4 [shape = 'u8[65536]{0}', space=vmem, size = 0x10000, scoped, tag = 'input window, operand 2']
    #allocation5 [shape = 's32[2]{0}', space=sflag, size = 0x8, scoped, tag = 'scoped memory for tpu_custom_call.1']
    %9 = vsyncpa [#allocation3], 0
    %s10 = scalar_lea.sflag [#allocation3], 1
    %11 = vsyncpa %s10, 0
    %12 = vsyncpa [#allocation5], 0
    %s13 = scalar_lea.sflag [#allocation5], 1
    %14 = vsyncpa %s13, 0
    loop: start=0, step=1, limit=4
    $region2: #{tpu_custom_call.1} parent=1 // loop_pre_header
      _
    $region3: #{tpu_custom_call.1} parent=1 // loop_header
      %s16 = sphi 0, %s20
      %p17 = scmp.ge.s32.totalorder %s16, 4
      %s26 = sphi 0, %s28
      %s29 = sphi 0, %s26
      %s30 = sphi 0, %s29
      %s46 = sphi 0, %s30
      %s52 = sphi 0, %s54
      %s55 = sphi 0, %s52
      %s56 = sphi 0, %s55
      %s72 = sphi 0, %s56
      %s78 = sphi 0, %s80
      %s81 = sphi 0, %s78
      %s82 = sphi 0, %s81
      %s98 = sphi 0, %s82
      %s104 = sphi 0, %s106
      %s107 = sphi 0, %s104
      %s108 = sphi 0, %s107
      %s124 = sphi 0, %s108
      %s130 = sphi 0, %s132
      %s133 = sphi 0, %s130
      %s134 = sphi 0, %s133
      %s150 = sphi 0, %s134
    $region4: #{tpu_custom_call.1} parent=1 // loop_header_branch
      %19 = sbr.rel (%p17) target = $region8
    $region5: #{tpu_custom_call.1} parent=1 // loop_body
      %s21 = ssub.s32 %s16, 1
      %s22 = ssub.s32 %s16, 2
      %s23 = sadd.s32 %s16, 1
      %s24 = ssub.s32 %s16, %s23
      %p25 = scmp.eq.s32.totalorder %s24, 0
      %s27 = sadd.s32 %s26, 1
      %s28 = scalar_select %p25, %s26, %s27
      %p31 = pneg %p25
      %p32 = scmp.eq.s32.totalorder %s16, 1
      %p33 = por %p31, %p32
      %p34 = scmp.ne.s32.totalorder %s26, %s29
      %p35 = scmp.eq.s32.totalorder %s16, 0
      %p36 = por %p34, %p35
      %p37 = scmp.ne.s32.totalorder %s26, %s29
      %p38 = scmp.eq.s32.totalorder %s21, 1
      %p39 = por %p37, %p38
      %p40 = scmp.ne.s32.totalorder %s29, %s30
      %p41 = scmp.eq.s32.totalorder %s21, 0
      %p42 = por %p40, %p41
      %p43 = scmp.ne.s32.totalorder %s29, %s30
      %p44 = scmp.eq.s32.totalorder %s22, 1
      %p45 = por %p43, %p44
      %p47 = scmp.ne.s32.totalorder %s30, %s46
      %p48 = scmp.eq.s32.totalorder %s22, 0
      %p49 = por %p47, %p48
      %s50 = ssub.s32 %s16, %s23
      %p51 = scmp.eq.s32.totalorder %s50, 0
      %s53 = sadd.s32 %s52, 1
      %s54 = scalar_select %p51, %s52, %s53
      %p57 = pneg %p51
      %p58 = scmp.eq.s32.totalorder %s16, 1
      %p59 = por %p57, %p58
      %p60 = scmp.ne.s32.totalorder %s52, %s55
      %p61 = scmp.eq.s32.totalorder %s16, 0
      %p62 = por %p60, %p61
      %p63 = scmp.ne.s32.totalorder %s52, %s55
      %p64 = scmp.eq.s32.totalorder %s21, 1
      %p65 = por %p63, %p64
      %p66 = scmp.ne.s32.totalorder %s55, %s56
      %p67 = scmp.eq.s32.totalorder %s21, 0
      %p68 = por %p66, %p67
      %p69 = scmp.ne.s32.totalorder %s55, %s56
      %p70 = scmp.eq.s32.totalorder %s22, 1
      %p71 = por %p69, %p70
      %p73 = scmp.ne.s32.totalorder %s56, %s72
      %p74 = scmp.eq.s32.totalorder %s22, 0
      %p75 = por %p73, %p74
      %s76 = ssub.s32 %s16, %s23
      %p77 = scmp.eq.s32.totalorder %s76, 0
      %s79 = sadd.s32 %s78, 1
      %s80 = scalar_select %p77, %s78, %s79
      %p83 = pneg %p77
      %p84 = scmp.eq.s32.totalorder %s16, 1
      %p85 = por %p83, %p84
      %p86 = scmp.ne.s32.totalorder %s78, %s81
      %p87 = scmp.eq.s32.totalorder %s16, 0
      %p88 = por %p86, %p87
      %p89 = scmp.ne.s32.totalorder %s78, %s81
      %p90 = scmp.eq.s32.totalorder %s21, 1
      %p91 = por %p89, %p90
      %p92 = scmp.ne.s32.totalorder %s81, %s82
      %p93 = scmp.eq.s32.totalorder %s21, 0
      %p94 = por %p92, %p93
      %p95 = scmp.ne.s32.totalorder %s81, %s82
      %p96 = scmp.eq.s32.totalorder %s22, 1
      %p97 = por %p95, %p96
      %p99 = scmp.ne.s32.totalorder %s82, %s98
      %p100 = scmp.eq.s32.totalorder %s22, 0
      %p101 = por %p99, %p100
      %s102 = ssub.s32 %s16, %s23
      %p103 = scmp.eq.s32.totalorder %s102, 0
      %s105 = sadd.s32 %s104, 1
      %s106 = scalar_select %p103, %s104, %s105
      %p109 = pneg %p103
      %p110 = scmp.eq.s32.totalorder %s16, 1
      %p111 = por %p109, %p110
      %p112 = scmp.ne.s32.totalorder %s104, %s107
      %p113 = scmp.eq.s32.totalorder %s16, 0
      %p114 = por %p112, %p113
      %p115 = scmp.ne.s32.totalorder %s104, %s107
      %p116 = scmp.eq.s32.totalorder %s21, 1
      %p117 = por %p115, %p116
      %p118 = scmp.ne.s32.totalorder %s107, %s108
      %p119 = scmp.eq.s32.totalorder %s21, 0
      %p120 = por %p118, %p119
      %p121 = scmp.ne.s32.totalorder %s107, %s108
      %p122 = scmp.eq.s32.totalorder %s22, 1
      %p123 = por %p121, %p122
      %p125 = scmp.ne.s32.totalorder %s108, %s124
      %p126 = scmp.eq.s32.totalorder %s22, 0
      %p127 = por %p125, %p126
      %s128 = ssub.s32 %s16, %s23
      %p129 = scmp.eq.s32.totalorder %s128, 0
      %s131 = sadd.s32 %s130, 1
      %s132 = scalar_select %p129, %s130, %s131
      %p135 = pneg %p129
      %p136 = scmp.eq.s32.totalorder %s16, 1
      %p137 = por %p135, %p136
      %p138 = scmp.ne.s32.totalorder %s130, %s133
      %p139 = scmp.eq.s32.totalorder %s16, 0
      %p140 = por %p138, %p139
      %p141 = scmp.ne.s32.totalorder %s130, %s133
      %p142 = scmp.eq.s32.totalorder %s21, 1
      %p143 = por %p141, %p142
      %p144 = scmp.ne.s32.totalorder %s133, %s134
      %p145 = scmp.eq.s32.totalorder %s21, 0
      %p146 = por %p144, %p145
      %p147 = scmp.ne.s32.totalorder %s133, %s134
      %p148 = scmp.eq.s32.totalorder %s22, 1
      %p149 = por %p147, %p148
      %p151 = scmp.ne.s32.totalorder %s134, %s150
      %p152 = scmp.eq.s32.totalorder %s22, 0
      %p153 = por %p151, %p152
      %p154 = scmp.le.s32.totalorder 1, %s16
      %p155 = scmp.lt.s32.totalorder %s16, 3
      %p156 = pnand %p154, %p155
      %p157 = pneg %p156
      // Predicated region
      $region9: #{tpu_custom_call.1} parent=5 // pred_check
        _
      $region10: #{tpu_custom_call.1} parent=5 // pred_check_branch
        %159 = sbr.rel (%p156) target = $region12
      $region11: #{tpu_custom_call.1} parent=5 // pred_region
        %s160 = ssub.s32 %s16, 1
      $region12: #{tpu_custom_call.1} parent=5 // pred_fallthru
        _
      %p161 = scmp.lt.s32.totalorder %s16, 2
      // Predicated region
      $region13: #{tpu_custom_call.1} parent=5 // pred_check
        %p162 = pneg %p161
      $region14: #{tpu_custom_call.1} parent=5 // pred_check_branch
        %164 = sbr.rel (%p162) target = $region16
      $region15: #{tpu_custom_call.1} parent=5 // pred_region
        // Predicated region
        $region17: #{tpu_custom_call.1} parent=15 // pred_check
          %p165 = pneg %p36
        $region18: #{tpu_custom_call.1} parent=15 // pred_check_branch
          %167 = sbr.rel (%p165) target = $region20
        $region19: #{tpu_custom_call.1} parent=15 // pred_region
          %p168 = scmp.lt.s32.totalorder %s16, 1
          %s169 = scalar_select %p168, %s16, 1
          %s170 = smul.addr %s169, 8
          %s171 = scalar_lea.vmem %s0, %s170
        $region20: #{tpu_custom_call.1} parent=15 // pred_fallthru
          _
        // Predicated region
        $region21: #{tpu_custom_call.1} parent=15 // pred_check
          %p172 = pneg %p62
        $region22: #{tpu_custom_call.1} parent=15 // pred_check_branch
          %174 = sbr.rel (%p172) target = $region24
        $region23: #{tpu_custom_call.1} parent=15 // pred_region
          %s175 = sand.u32 %s52, 1
          %s176 = scalar_lea.sflag [#allocation3], %s175
          %s177 = sand.u32 %s52, 1
          %s178 = smul.addr %s177, 64
          %s179 = scalar_lea.vmem [#allocation2], %s178
          %s180 = smul.u32 8, %s16
          %s182 = ssub.s32 1024, 1024
          %183 = vsyncadd %s176, %s182
          %s184 = smul.addr %s180, 128
          %s185 = scalar_lea.hbm %s1, %s184
          %s186 = sshll.u32 %s179, 4
          %s187 = int_to_ptr.vmem [resolvable:$true] %s186
          %192 = dma.hbm_to_vmem [thread:$0]  %s185, 1024, %s187, %s176, 128, 128, 8
        $region24: #{tpu_custom_call.1} parent=15 // pred_fallthru
          _
        // Predicated region
        $region25: #{tpu_custom_call.1} parent=15 // pred_check
          %p193 = pneg %p88
        $region26: #{tpu_custom_call.1} parent=15 // pred_check_branch
          %195 = sbr.rel (%p193) target = $region28
        $region27: #{tpu_custom_call.1} parent=15 // pred_region
          %s196 = sand.u32 %s78, 1
          %s197 = scalar_lea.sflag [#allocation5], %s196
          %s198 = sand.u32 %s78, 1
          %s199 = smul.addr %s198, 64
          %s200 = scalar_lea.vmem [#allocation4], %s199
          %s201 = smul.u32 8, %s16
          %s203 = ssub.s32 1024, 1024
          %204 = vsyncadd %s197, %s203
          %s205 = smul.addr %s201, 128
          %s206 = scalar_lea.hbm %s2, %s205
          %s207 = sshll.u32 %s200, 4
          %s208 = int_to_ptr.vmem [resolvable:$true] %s207
          %213 = dma.hbm_to_vmem [thread:$0]  %s206, 1024, %s208, %s197, 128, 128, 8
        $region28: #{tpu_custom_call.1} parent=15 // pred_fallthru
          _
        // Predicated region
        $region29: #{tpu_custom_call.1} parent=15 // pred_check
          %p214 = pneg %p114
        $region30: #{tpu_custom_call.1} parent=15 // pred_check_branch
          %216 = sbr.rel (%p214) target = $region32
        $region31: #{tpu_custom_call.1} parent=15 // pred_region
          %p217 = scmp.lt.s32.totalorder %s16, 1
          %s218 = scalar_select %p217, %s16, 1
          %s219 = smul.addr %s218, 8
          %s220 = scalar_lea.vmem %s3, %s219
        $region32: #{tpu_custom_call.1} parent=15 // pred_fallthru
          _
      $region16: #{tpu_custom_call.1} parent=5 // pred_fallthru
        _
      %p221 = scmp.le.s32.totalorder 1, %s16
      %p222 = scmp.lt.s32.totalorder %s16, 3
      %p223 = pnand %p221, %p222
      %p224 = pneg %p223
      // Predicated region
      $region33: #{tpu_custom_call.1} parent=5 // pred_check
        _
      $region34: #{tpu_custom_call.1} parent=5 // pred_check_branch
        %226 = sbr.rel (%p223) target = $region36
      $region35: #{tpu_custom_call.1} parent=5 // pred_region
        %s227 = ssub.s32 %s16, 1
        %s228 = sand.u32 %s55, 1
        %s229 = scalar_lea.sflag [#allocation3], %s228
        %s230 = sand.u32 %s55, 1
        %s231 = smul.addr %s230, 64
        %s232 = scalar_lea.vmem [#allocation2], %s231
        // Predicated region
        $region37: #{tpu_custom_call.1} parent=35 // pred_check
          %p233 = pneg %p68
        $region38: #{tpu_custom_call.1} parent=35 // pred_check_branch
          %235 = sbr.rel (%p233) target = $region40
        $region39: #{tpu_custom_call.1} parent=35 // pred_region
          %236 = dma.done %s229, 1024
        $region40: #{tpu_custom_call.1} parent=35 // pred_fallthru
          _
        %s237 = sand.u32 %s81, 1
        %s238 = scalar_lea.sflag [#allocation5], %s237
        %s239 = sand.u32 %s81, 1
        %s240 = smul.addr %s239, 64
        %s241 = scalar_lea.vmem [#allocation4], %s240
        // Predicated region
        $region41: #{tpu_custom_call.1} parent=35 // pred_check
          %p242 = pneg %p94
        $region42: #{tpu_custom_call.1} parent=35 // pred_check_branch
          %244 = sbr.rel (%p242) target = $region44
        $region43: #{tpu_custom_call.1} parent=35 // pred_region
          %245 = dma.done %s238, 1024
        $region44: #{tpu_custom_call.1} parent=35 // pred_fallthru
          _
        %p246 = scmp.lt.s32.totalorder %s21, 1
        %s247 = scalar_select %p246, %s21, 1
        %s248 = smul.addr %s247, 8
        %s249 = scalar_lea.vmem %s0, %s248
        %p250 = pneg %p42
        %p251 = pneg %p39
        %s252 = sand.u32 %s55, 1
        %s253 = scalar_lea.sflag [#allocation3], %s252
        %s254 = sand.u32 %s55, 1
        %s255 = smul.addr %s254, 64
        %s256 = scalar_lea.vmem [#allocation2], %s255
        %p257 = pneg %p68
        %p258 = pneg %p65
        %s259 = sand.u32 %s81, 1
        %s260 = scalar_lea.sflag [#allocation5], %s259
        %s261 = sand.u32 %s81, 1
        %s262 = smul.addr %s261, 64
        %s263 = scalar_lea.vmem [#allocation4], %s262
        %p264 = pneg %p94
        %p265 = pneg %p91
        %p266 = scmp.lt.s32.totalorder %s21, 1
        %s267 = scalar_select %p266, %s21, 1
        %s268 = smul.addr %s267, 8
        %s269 = scalar_lea.vmem %s3, %s268
        %p270 = pneg %p120
        %p271 = pneg %p117
        %p272 = pneg %p146
        %p273 = pneg %p143
        %p274 = scmp.lt.s32.totalorder %s21, 1
        %s275 = scalar_select %p274, %s21, 1
        %s276 = smul.addr %s275, 8
        %s277 = scalar_lea.vmem %s4, %s276
        %p278 = scmp.lt.s32.totalorder %s21, 1
        %s279 = scalar_select %p278, %s21, 1
        %s280 = smul.addr %s279, 8
        %s281 = scalar_lea.vmem %s0, %s280
        %s282 = smul.u32 8, %s21
        %s283 = smul.u32 8, %s21
        %p284 = scmp.lt.s32.totalorder %s21, 1
        %s285 = scalar_select %p284, %s21, 1
        %s286 = smul.addr %s285, 8
        %s287 = scalar_lea.vmem %s3, %s286
        %p288 = scmp.lt.s32.totalorder %s21, 1
        %s289 = scalar_select %p288, %s21, 1
        %s290 = smul.addr %s289, 8
        %s291 = scalar_lea.vmem %s4, %s290
        %v292 = vld [vmem:[%s281] sm:$0xff]
        %v293 = vld [vmem:[%s232] sm:$0xff]
        %v294 = vld [vmem:[%s232 + $0x8] sm:$0xff]
        %v295 = vld [vmem:[%s232 + $0x10] sm:$0xff]
        %v296 = vld [vmem:[%s232 + $0x18] sm:$0xff]
        %v297 = vld [vmem:[%s232 + $0x20] sm:$0xff]
        %v298 = vld [vmem:[%s232 + $0x28] sm:$0xff]
        %v299 = vld [vmem:[%s232 + $0x30] sm:$0xff]
        %v300 = vld [vmem:[%s232 + $0x38] sm:$0xff]
        %v301 = vld [vmem:[%s241] sm:$0xff]
        %v302 = vld [vmem:[%s241 + $0x8] sm:$0xff]
        %v303 = vld [vmem:[%s241 + $0x10] sm:$0xff]
        %v304 = vld [vmem:[%s241 + $0x18] sm:$0xff]
        %v305 = vld [vmem:[%s241 + $0x20] sm:$0xff]
        %v306 = vld [vmem:[%s241 + $0x28] sm:$0xff]
        %v307 = vld [vmem:[%s241 + $0x30] sm:$0xff]
        %v308 = vld [vmem:[%s241 + $0x38] sm:$0xff]
        %v310 = vcombine.high %v292, %v292
        %v312 = vunpack.c.l.s4 1966171168
        %v313 = vunpack.c.0.s8 %v312
        %v314 = vlaneseq
        %v315 = vshrl.u32 %v314, 7
        %v316 = vsub.s32 %v313, %v315
        %v317 = vrot.slane %v292, %v316
        %v319 = vunpack.c.l.s4 1966171168
        %v320 = vunpack.c.0.s8 %v319
        %v321 = vlaneseq
        %v322 = vshrl.u32 %v321, 7
        %v323 = vsub.s32 %v320, %v322
        %v324 = vrot.slane %v310, %v323
        %v325 = vcombine.high %v317, %v317
        %v326 = vcombine.high %v324, %v324
        %v328 = vunpack.c.l.s4 1966171168
        %v329 = vunpack.c.0.s8 %v328
        %v330 = vlaneseq
        %v331 = vshrl.u32 %v330, 7
        %v332 = vsub.s32 %v329, %v331
        %v333 = vrot.slane %v317, %v332
        %v335 = vunpack.c.l.s4 1966171168
        %v336 = vunpack.c.0.s8 %v335
        %v337 = vlaneseq
        %v338 = vshrl.u32 %v337, 7
        %v339 = vsub.s32 %v336, %v338
        %v340 = vrot.slane %v324, %v339
        %v342 = vunpack.c.l.s4 1966171168
        %v343 = vunpack.c.0.s8 %v342
        %v344 = vlaneseq
        %v345 = vshrl.u32 %v344, 7
        %v346 = vsub.s32 %v343, %v345
        %v347 = vrot.slane %v325, %v346
        %v349 = vunpack.c.l.s4 1966171168
        %v350 = vunpack.c.0.s8 %v349
        %v351 = vlaneseq
        %v352 = vshrl.u32 %v351, 7
        %v353 = vsub.s32 %v350, %v352
        %v354 = vrot.slane %v326, %v353
        %v355 = vcombine.high %v333, %v333
        %v356 = vcombine.high %v340, %v340
        %v357 = vcombine.high %v347, %v347
        %v358 = vcombine.high %v354, %v354
        %v359 = vlaneseq
        %v360 = vshrl.u32 %v359, 7
        %v361 = vsub.s32 0, %v360
        %v362 = vrot.slane %v333, %v361
        %v363 = vlaneseq
        %v364 = vshrl.u32 %v363, 7
        %v365 = vsub.s32 0, %v364
        %v366 = vrot.slane %v347, %v365
        %v367 = vlaneseq
        %v368 = vshrl.u32 %v367, 7
        %v369 = vsub.s32 0, %v368
        %v370 = vrot.slane %v355, %v369
        %v371 = vlaneseq
        %v372 = vshrl.u32 %v371, 7
        %v373 = vsub.s32 0, %v372
        %v374 = vrot.slane %v357, %v373
        %v375 = vlaneseq
        %v376 = vshrl.u32 %v375, 7
        %v377 = vsub.s32 0, %v376
        %v378 = vrot.slane %v340, %v377
        %v379 = vlaneseq
        %v380 = vshrl.u32 %v379, 7
        %v381 = vsub.s32 0, %v380
        %v382 = vrot.slane %v354, %v381
        %v383 = vlaneseq
        %v384 = vshrl.u32 %v383, 7
        %v385 = vsub.s32 0, %v384
        %v386 = vrot.slane %v356, %v385
        %v387 = vlaneseq
        %v388 = vshrl.u32 %v387, 7
        %v389 = vsub.s32 0, %v388
        %v390 = vrot.slane %v358, %v389
        %v399 = vsub.f32 %v362, %v293
        %v400 = vsub.f32 %v366, %v294
        %v401 = vsub.f32 %v370, %v295
        %v402 = vsub.f32 %v374, %v296
        %v403 = vsub.f32 %v378, %v297
        %v404 = vsub.f32 %v382, %v298
        %v405 = vsub.f32 %v386, %v299
        %v406 = vsub.f32 %v390, %v300
        %v407 = vrcp.pop %v301
        %v408 = vmul.f32 %v399, %v407
        %v409 = vrcp.pop %v302
        %v410 = vmul.f32 %v400, %v409
        %v411 = vrcp.pop %v303
        %v412 = vmul.f32 %v401, %v411
        %v413 = vrcp.pop %v304
        %v414 = vmul.f32 %v402, %v413
        %v415 = vrcp.pop %v305
        %v416 = vmul.f32 %v403, %v415
        %v417 = vrcp.pop %v306
        %v418 = vmul.f32 %v404, %v417
        %v419 = vrcp.pop %v307
        %v420 = vmul.f32 %v405, %v419
        %v421 = vrcp.pop %v308
        %v422 = vmul.f32 %v406, %v421
        %v423 = vmul.f32 %v408, %v408
        %v424 = vmul.f32 %v410, %v410
        %v425 = vmul.f32 %v412, %v412
        %v426 = vmul.f32 %v414, %v414
        %v427 = vmul.f32 %v416, %v416
        %v428 = vmul.f32 %v418, %v418
        %v429 = vmul.f32 %v420, %v420
        %v430 = vmul.f32 %v422, %v422
        %v431 = vlog2.pop %v301
        %v432 = vmul.f32 %v431, 0.6931472
        %v433 = vlog2.pop %v302
        %v434 = vmul.f32 %v433, 0.6931472
        %v435 = vlog2.pop %v303
        %v436 = vmul.f32 %v435, 0.6931472
        %v437 = vlog2.pop %v304
        %v438 = vmul.f32 %v437, 0.6931472
        %v439 = vlog2.pop %v305
        %v440 = vmul.f32 %v439, 0.6931472
        %v441 = vlog2.pop %v306
        %v442 = vmul.f32 %v441, 0.6931472
        %v443 = vlog2.pop %v307
        %v444 = vmul.f32 %v443, 0.6931472
        %v445 = vlog2.pop %v308
        %v446 = vmul.f32 %v445, 0.6931472
        %v447 = vmul.f32 %v432, 2.0
        %v448 = vmul.f32 %v434, 2.0
        %v449 = vmul.f32 %v436, 2.0
        %v450 = vmul.f32 %v438, 2.0
        %v451 = vmul.f32 %v440, 2.0
        %v452 = vmul.f32 %v442, 2.0
        %v453 = vmul.f32 %v444, 2.0
        %v454 = vmul.f32 %v446, 2.0
        %v455 = vadd.f32 %v423, %v447
        %v456 = vadd.f32 %v424, %v448
        %v457 = vadd.f32 %v425, %v449
        %v458 = vadd.f32 %v426, %v450
        %v459 = vadd.f32 %v427, %v451
        %v460 = vadd.f32 %v428, %v452
        %v461 = vadd.f32 %v429, %v453
        %v462 = vadd.f32 %v430, %v454
        %463 = vadd.xlane.f32.xlu0 %v455
        %v464 = vpop.xlane.xlu0 %463
        %465 = vadd.xlane.f32.xlu0 %v456
        %v466 = vpop.xlane.xlu0 %465
        %467 = vadd.xlane.f32.xlu0 %v457
        %v468 = vpop.xlane.xlu0 %467
        %469 = vadd.xlane.f32.xlu0 %v458
        %v470 = vpop.xlane.xlu0 %469
        %471 = vadd.xlane.f32.xlu0 %v459
        %v472 = vpop.xlane.xlu0 %471
        %473 = vadd.xlane.f32.xlu0 %v460
        %v474 = vpop.xlane.xlu0 %473
        %475 = vadd.xlane.f32.xlu0 %v461
        %v476 = vpop.xlane.xlu0 %475
        %477 = vadd.xlane.f32.xlu0 %v462
        %v478 = vpop.xlane.xlu0 %477
        %v479 = vmul.f32 %v464, -0.5
        %v480 = vmul.f32 %v466, -0.5
        %v481 = vmul.f32 %v468, -0.5
        %v482 = vmul.f32 %v470, -0.5
        %v483 = vmul.f32 %v472, -0.5
        %v484 = vmul.f32 %v474, -0.5
        %v485 = vmul.f32 %v476, -0.5
        %v486 = vmul.f32 %v478, -0.5
        %v487 = vsub.f32 %v479, 117.62413
        %v488 = vsub.f32 %v480, 117.62413
        %v489 = vsub.f32 %v481, 117.62413
        %v490 = vsub.f32 %v482, 117.62413
        %v491 = vsub.f32 %v483, 117.62413
        %v492 = vsub.f32 %v484, 117.62413
        %v493 = vsub.f32 %v485, 117.62413
        %v494 = vsub.f32 %v486, 117.62413
        %v495 = vlaneseq
        %v496 = vand.u32 %v495, 127
        %v497 = vld [vmem:[%s287] sm:$0xff]
        %498 = vset.pattern.permute.xlu0 0
        %499 = vperm.xlu0 %498, %v497
        %v500 = vpop.permute.xlu0 %499
        %vm501 = vcmp.lt.s32.totalorder %v496, %v500
        %v510 = vlaneseq
        %v511 = vshrl.u32 %v510, 7
        %v512 = vsub.s32 %v496, %v511
        %v513 = vrot.slane %v487, %v512
        %v514 = vlaneseq
        %v515 = vshrl.u32 %v514, 7
        %v516 = vsub.s32 %v496, %v515
        %v517 = vrot.slane %v488, %v516
        %v518 = vlaneseq
        %v519 = vshrl.u32 %v518, 7
        %v520 = vsub.s32 %v496, %v519
        %v521 = vrot.slane %v489, %v520
        %v522 = vlaneseq
        %v523 = vshrl.u32 %v522, 7
        %v524 = vsub.s32 %v496, %v523
        %v525 = vrot.slane %v490, %v524
        %v526 = vlaneseq
        %v527 = vshrl.u32 %v526, 7
        %v528 = vsub.s32 %v496, %v527
        %v529 = vrot.slane %v491, %v528
        %v530 = vlaneseq
        %v531 = vshrl.u32 %v530, 7
        %v532 = vsub.s32 %v496, %v531
        %v533 = vrot.slane %v492, %v532
        %v534 = vlaneseq
        %v535 = vshrl.u32 %v534, 7
        %v536 = vsub.s32 %v496, %v535
        %v537 = vrot.slane %v493, %v536
        %v538 = vlaneseq
        %v539 = vshrl.u32 %v538, 7
        %v540 = vsub.s32 %v496, %v539
        %v541 = vrot.slane %v494, %v540
        %vm542 = vcmask 1041409
        %v543 = vsel %vm542, %v517, %v513
        %vm544 = vcmask 1042434
        %v545 = vsel %vm544, %v521, %v543
        %vm546 = vcmask 1043459
        %v547 = vsel %vm546, %v525, %v545
        %vm548 = vcmask 1044484
        %v549 = vsel %vm548, %v529, %v547
        %vm550 = vcmask 1045509
        %v551 = vsel %vm550, %v533, %v549
        %vm552 = vcmask 1046534
        %v553 = vsel %vm552, %v537, %v551
        %vm554 = vcmask 1047559
        %v555 = vsel %vm554, %v541, %v553
        %v557 = vsel %vm501, %v555, 0.0
        %vm558 = vcmask 64512
        %559 = vst.msk [vmem:[%s291] sm:$0xff] %vm558, %v557
        %p560 = scmp.lt.s32.totalorder %s21, 1
        %s561 = scalar_select %p560, %s21, 1
        %s562 = smul.addr %s561, 8
        %s563 = scalar_lea.vmem %s4, %s562
        // Predicated region
        $region45: #{tpu_custom_call.1} parent=35 // pred_check
          %p564 = pneg %p143
        $region46: #{tpu_custom_call.1} parent=35 // pred_check_branch
          %566 = sbr.rel (%p564) target = $region48
        $region47: #{tpu_custom_call.1} parent=35 // pred_region
          _
        $region48: #{tpu_custom_call.1} parent=35 // pred_fallthru
          _
      $region36: #{tpu_custom_call.1} parent=5 // pred_fallthru
        _
      %p567 = scmp.le.s32.totalorder 2, %s16
      // Predicated region
      $region49: #{tpu_custom_call.1} parent=5 // pred_check
        %p568 = pneg %p567
      $region50: #{tpu_custom_call.1} parent=5 // pred_check_branch
        %570 = sbr.rel (%p568) target = $region52
      $region51: #{tpu_custom_call.1} parent=5 // pred_region
        %s571 = ssub.s32 %s16, 2
        // Predicated region
        $region53: #{tpu_custom_call.1} parent=51 // pred_check
          %p572 = pneg %p149
        $region54: #{tpu_custom_call.1} parent=51 // pred_check_branch
          %574 = sbr.rel (%p572) target = $region56
        $region55: #{tpu_custom_call.1} parent=51 // pred_region
          %p575 = scmp.lt.s32.totalorder %s22, 1
          %s576 = scalar_select %p575, %s22, 1
          %s577 = smul.addr %s576, 8
          %s578 = scalar_lea.vmem %s4, %s577
        $region56: #{tpu_custom_call.1} parent=51 // pred_fallthru
          _
      $region52: #{tpu_custom_call.1} parent=5 // pred_fallthru
        _
    $region6: #{tpu_custom_call.1} parent=1 // loop_footer
      %s20 = sadd.s32 1, %s16
    $region7: #{tpu_custom_call.1} parent=1 // loop_footer_branch
      %15 = sbr.rel target = $region3
    $region8: #{tpu_custom_call.1} parent=1 // loop_exit
      _
    %579 = vsyncpa [#allocation3], 1
    %s580 = scalar_lea.sflag [#allocation3], 1
    %581 = vsyncpa %s580, 1
    %582 = vsyncpa [#allocation5], 1
    %s583 = scalar_lea.sflag [#allocation5], 1
    %584 = vsyncpa %s583, 1

</llo_original>
